<compile_context>
chip_gen: v7x
topology: tpu7x:2x2x1
jax: 0.10.0
libtpu: 0.0.40
codegen_flags: <defaults>
</compile_context>

<pallas_src>
import functools

import jax
import jax.numpy as jnp
from jax.experimental import pallas as pl
from jax.experimental.pallas import tpu as pltpu

# Synthetic config (replaces load_config() / train_config.yml)
CLASSES = 10
INPUT_DIM = 28 * 28          # 784
OUTPUT_DIMS = [128, 64]      # hidden layer sizes (the `output_dims` ctor arg)
DROPOUT = 0.2                # unused at inference (identity)

LANE = 128                   # TPU lane width


def _round_up(x: int, m: int) -> int:
    return (x + m - 1) // m * m


def _cdiv(a: int, b: int) -> int:
    return -(-a // b)


# ---------------------------------------------------------------------------
# Fused Pallas kernel: all Linears + ReLUs + log_softmax in one body.
# ---------------------------------------------------------------------------
def make_fused_kernel(num_layers: int, num_classes: int):
    def kernel(*refs):
        # refs = (x_ref, w1, b1, w2, b2, ..., wL, bL, o_ref)
        x_ref = refs[0]
        o_ref = refs[-1]
        wb = refs[1:-1]

        h = x_ref[...]                         # bf16 activations for layer 0
        logits = None
        for li in range(num_layers):
            w_ref = wb[2 * li]                 # bf16 (in[_p], out_p)
            b_ref = wb[2 * li + 1]             # f32  (1, out_p)
            # MXU matmul in bf16 with f32 accumulation; bias add on VPU in f32.
            lhs = h if h.dtype == jnp.bfloat16 else h.astype(jnp.bfloat16)
            y = jnp.dot(lhs, w_ref[...],
                        preferred_element_type=jnp.float32) + b_ref[...]
            if li < num_layers - 1:
                h = jnp.maximum(y, 0.0)        # ReLU; Dropout = identity (eval)
            else:
                logits = y

        # Mask padded class lanes BEFORE the row max so the normalizer is exact.
        col = jax.lax.broadcasted_iota(jnp.int32, logits.shape, 1)
        logits = jnp.where(col < num_classes, logits, jnp.float32(-1e30))

        # Numerically stable log_softmax over the class axis (exp/log -> EUP).
        m = jnp.max(logits, axis=-1, keepdims=True)
        s = logits - m
        lse = jnp.log(jnp.sum(jnp.exp(s), axis=-1, keepdims=True))
        o_ref[...] = (s - lse).astype(o_ref.dtype)

    return kernel


# ---------------------------------------------------------------------------
# One-time parameter preparation (hoisted out of the per-call path).
# ---------------------------------------------------------------------------
def prepare_params(params):
    """Pad to lane-aligned shapes and cast weights to bf16 exactly once."""
    prepared = []
    for i, (w, b) in enumerate(params):
        kin, kout = w.shape
        # Do NOT pad the 784 contraction dim of layer 0 (matches unpadded x);
        # hidden contraction dims are padded to match the previous layer's
        # padded output (zero rows multiply exact-zero padded hidden units).
        kin_p = kin if i == 0 else _round_up(kin, LANE)
        kout_p = _round_up(kout, LANE)
        w_p = jnp.pad(w, ((0, kin_p - kin), (0, kout_p - kout))).astype(jnp.bfloat16)
        b_p = jnp.pad(b, ((0, 0), (0, kout_p - kout))).astype(jnp.float32)
        prepared.append((w_p, b_p))
    return prepared


def _batch_tiling(batch: int, batch_tile: int):
    """Balanced batch tiles: tb multiple of 16 (bf16 packing), minimal padding."""
    n_tiles = max(1, _cdiv(batch, batch_tile))
    # v7x megacore: give the "parallel" batch axis >=2 grid steps once there is
    # enough work for two full 16-row tiles (no effect on v5e/v6e: 1 TC).
    if batch >= 32 and n_tiles < 2:
        n_tiles = 2
    tb = _round_up(_cdiv(batch, n_tiles), 16)
    batch_p = _round_up(batch, tb)
    return tb, batch_p


# ---------------------------------------------------------------------------
# Jitted forward: pad batch rows, tile the batch, call the fused kernel.
# ---------------------------------------------------------------------------
@functools.partial(jax.jit, static_argnames=("num_classes", "batch_tile"))
def net_forward(x, prepared_params, *, num_classes=CLASSES, batch_tile=2048):
    """x: (batch, 784); prepared_params: output of prepare_params()."""
    batch, in_dim = x.shape
    num_layers = len(prepared_params)
    out_p = prepared_params[-1][1].shape[1]          # 10 -> 128 (lane-dense)

    tb, batch_p = _batch_tiling(batch, batch_tile)

    # Stream x in bf16 (halves the dominant HBM stream); pad batch rows only.
    x_p = jnp.pad(x.astype(jnp.bfloat16), ((0, batch_p - batch), (0, 0)))

    grid = (batch_p // tb,)
    in_specs = [pl.BlockSpec((tb, in_dim), lambda i: (i, 0))]
    flat_inputs = [x_p]
    for w_p, b_p in prepared_params:
        in_specs.append(pl.BlockSpec(w_p.shape, lambda i: (0, 0)))
        in_specs.append(pl.BlockSpec(b_p.shape, lambda i: (0, 0)))
        flat_inputs += [w_p, b_p]

    flops = 2 * batch_p * sum(int(w.shape[0]) * int(w.shape[1])
                              for w, _ in prepared_params)
    bytes_accessed = (x_p.size * 2
                      + sum(int(w.size) * 2 + int(b.size) * 4
                            for w, b in prepared_params)
                      + batch_p * out_p * 2)
    cost = pl.CostEstimate(flops=flops,
                           transcendentals=batch_p * out_p,
                           bytes_accessed=bytes_accessed)

    out = pl.pallas_call(
        make_fused_kernel(num_layers, num_classes),
        out_shape=jax.ShapeDtypeStruct((batch_p, out_p), jnp.bfloat16),
        grid=grid,
        in_specs=in_specs,
        out_specs=pl.BlockSpec((tb, out_p), lambda i: (i, 0)),
        compiler_params=pltpu.CompilerParams(
            dimension_semantics=("parallel",)),      # shard batch across cores
        cost_estimate=cost,
    )(*flat_inputs)

    return out[:batch, :num_classes].astype(jnp.float32)


# ---------------------------------------------------------------------------
# Parameter init (deterministic, mirrors nn.Linear default init shapes)
# ---------------------------------------------------------------------------
def init_params(key, input_dim, output_dims, classes):
    dims = [input_dim] + list(output_dims) + [classes]
    params = []
    for i in range(len(dims) - 1):
        fan_in, fan_out = dims[i], dims[i + 1]
        key, kw, kb = jax.random.split(key, 3)
        bound = 1.0 / jnp.sqrt(fan_in)
        # stored as (in, out): transpose of PyTorch's (out, in)
        w = jax.random.uniform(kw, (fan_in, fan_out), jnp.float32, -bound, bound)
        b = jax.random.uniform(kb, (1, fan_out), jnp.float32, -bound, bound)
        params.append((w, b))
    return params


def net_forward_reference(x, params):
    """Pure-JAX f32 reference for correctness checking."""
    h = x
    for i, (w, b) in enumerate(params):
        h = h @ w + b
        if i < len(params) - 1:
            h = jnp.maximum(h, 0.0)
    return jax.nn.log_softmax(h, axis=1)


def _check(out, ref, batch):
    assert out.shape == (batch, CLASSES), out.shape
    row_sums = jnp.sum(jnp.exp(out), axis=1)
    assert jnp.allclose(row_sums, 1.0, atol=2e-2), row_sums
    # bf16 MXU operands + bf16 output writeback -> magnitude-scaled tolerance.
    assert jnp.allclose(out, ref, atol=5e-2, rtol=2e-2), \
        float(jnp.max(jnp.abs(out - ref)))


# ---------------------------------------------------------------------------
# Main
# ---------------------------------------------------------------------------
if __name__ == "__main__":
    key = jax.random.PRNGKey(0)
    key, kx1, kx2 = jax.random.split(key, 3)

    params = init_params(key, INPUT_DIM, OUTPUT_DIMS, CLASSES)
    prepared = prepare_params(params)          # pad/cast ONCE, reused below

    # Small batch: grid degenerates to a single step.
    batch1 = 8
    x1 = jax.random.normal(kx1, (batch1, INPUT_DIM), dtype=jnp.float32)
    out1 = jax.block_until_ready(net_forward(x1, prepared))
    _check(out1, net_forward_reference(x1, params), batch1)

    # Awkward medium batch: exercises balanced tiling + 2-step "parallel" grid.
    batch2 = 48
    x2 = jax.random.normal(kx2, (batch2, INPUT_DIM), dtype=jnp.float32)
    out2 = jax.block_until_ready(net_forward(x2, prepared))
    _check(out2, net_forward_reference(x2, params), batch2)

    print("KERNEL_OK")
</pallas_src>

<mosaic_0001>
module attributes {stable_mosaic.version = 11 : i64} {
  func.func @kernel(%arg0: i32, %arg1: memref<16x784xbf16, #tpu.memory_space<vmem>>, %arg2: memref<784x128xbf16, #tpu.memory_space<vmem>>, %arg3: memref<1x128xf32, #tpu.memory_space<vmem>>, %arg4: memref<128x128xbf16, #tpu.memory_space<vmem>>, %arg5: memref<1x128xf32, #tpu.memory_space<vmem>>, %arg6: memref<128x128xbf16, #tpu.memory_space<vmem>>, %arg7: memref<1x128xf32, #tpu.memory_space<vmem>>, %arg8: memref<16x128xbf16, #tpu.memory_space<vmem>>) attributes {dimension_semantics = [#tpu.dimension_semantics<parallel>], iteration_bounds = array<i64: 1>, scalar_prefetch = 0 : i64, scratch_operands = 0 : i64, tpu.core_type = #tpu.core_type<tc>, window_params = [{transform_indices = @transform_0, window_bounds = array<i64: 16, 784>}, {pipeline_mode = #tpu.pipeline_mode<synchronous>, transform_indices = @transform_1, window_bounds = array<i64: 784, 128>}, {pipeline_mode = #tpu.pipeline_mode<synchronous>, transform_indices = @transform_2, window_bounds = array<i64: 1, 128>}, {pipeline_mode = #tpu.pipeline_mode<synchronous>, transform_indices = @transform_3, window_bounds = array<i64: 128, 128>}, {pipeline_mode = #tpu.pipeline_mode<synchronous>, transform_indices = @transform_4, window_bounds = array<i64: 1, 128>}, {pipeline_mode = #tpu.pipeline_mode<synchronous>, transform_indices = @transform_5, window_bounds = array<i64: 128, 128>}, {pipeline_mode = #tpu.pipeline_mode<synchronous>, transform_indices = @transform_6, window_bounds = array<i64: 1, 128>}, {transform_indices = @transform_7, window_bounds = array<i64: 16, 128>}]} {
    %c0 = arith.constant 0 : index
    %c0_0 = arith.constant 0 : index
    %0 = vector.load %arg1[%c0, %c0_0] : memref<16x784xbf16, #tpu.memory_space<vmem>>, vector<16x784xbf16>
    %c0_1 = arith.constant 0 : index
    %c0_2 = arith.constant 0 : index
    %1 = vector.load %arg2[%c0_1, %c0_2] : memref<784x128xbf16, #tpu.memory_space<vmem>>, vector<784x128xbf16>
    %cst = arith.constant dense<0.000000e+00> : vector<16x128xf32>
    %2 = tpu.matmul %0, %1, %cst {dimension_numbers = #tpu.dot_dimension_numbers<[1], [0], [0], [1], [0, 0, 1, 1], [], []>} : vector<16x784xbf16>, vector<784x128xbf16>, vector<16x128xf32> -> vector<16x128xf32>
    %c0_3 = arith.constant 0 : index
    %c0_4 = arith.constant 0 : index
    %3 = vector.load %arg3[%c0_3, %c0_4] : memref<1x128xf32, #tpu.memory_space<vmem>>, vector<1x128xf32>
    %4 = vector.broadcast %3 : vector<1x128xf32> to vector<16x128xf32>
    %5 = arith.addf %2, %4 : vector<16x128xf32>
    %cst_5 = arith.constant 0.000000e+00 : f32
    %6 = vector.broadcast %cst_5 : f32 to vector<16x128xf32>
    %7 = arith.maximumf %5, %6 : vector<16x128xf32>
    %8 = arith.truncf %7 : vector<16x128xf32> to vector<16x128xbf16>
    %c0_6 = arith.constant 0 : index
    %c0_7 = arith.constant 0 : index
    %9 = vector.load %arg4[%c0_6, %c0_7] : memref<128x128xbf16, #tpu.memory_space<vmem>>, vector<128x128xbf16>
    %cst_8 = arith.constant dense<0.000000e+00> : vector<16x128xf32>
    %10 = tpu.matmul %8, %9, %cst_8 {dimension_numbers = #tpu.dot_dimension_numbers<[1], [0], [0], [1], [0, 0, 1, 1], [], []>} : vector<16x128xbf16>, vector<128x128xbf16>, vector<16x128xf32> -> vector<16x128xf32>
    %c0_9 = arith.constant 0 : index
    %c0_10 = arith.constant 0 : index
    %11 = vector.load %arg5[%c0_9, %c0_10] : memref<1x128xf32, #tpu.memory_space<vmem>>, vector<1x128xf32>
    %12 = vector.broadcast %11 : vector<1x128xf32> to vector<16x128xf32>
    %13 = arith.addf %10, %12 : vector<16x128xf32>
    %cst_11 = arith.constant 0.000000e+00 : f32
    %14 = vector.broadcast %cst_11 : f32 to vector<16x128xf32>
    %15 = arith.maximumf %13, %14 : vector<16x128xf32>
    %16 = arith.truncf %15 : vector<16x128xf32> to vector<16x128xbf16>
    %c0_12 = arith.constant 0 : index
    %c0_13 = arith.constant 0 : index
    %17 = vector.load %arg6[%c0_12, %c0_13] : memref<128x128xbf16, #tpu.memory_space<vmem>>, vector<128x128xbf16>
    %cst_14 = arith.constant dense<0.000000e+00> : vector<16x128xf32>
    %18 = tpu.matmul %16, %17, %cst_14 {dimension_numbers = #tpu.dot_dimension_numbers<[1], [0], [0], [1], [0, 0, 1, 1], [], []>} : vector<16x128xbf16>, vector<128x128xbf16>, vector<16x128xf32> -> vector<16x128xf32>
    %c0_15 = arith.constant 0 : index
    %c0_16 = arith.constant 0 : index
    %19 = vector.load %arg7[%c0_15, %c0_16] : memref<1x128xf32, #tpu.memory_space<vmem>>, vector<1x128xf32>
    %20 = vector.broadcast %19 : vector<1x128xf32> to vector<16x128xf32>
    %21 = arith.addf %18, %20 : vector<16x128xf32>
    %22 = tpu.iota {dimensions = array<i32: 1>} : vector<16x128xi32>
    %c10_i32 = arith.constant 10 : i32
    %23 = vector.broadcast %c10_i32 : i32 to vector<16x128xi32>
    %24 = arith.cmpi slt, %22, %23 : vector<16x128xi32>
    %cst_17 = arith.constant -1.000000e+30 : f32
    %25 = vector.broadcast %cst_17 : f32 to vector<16x128xf32>
    %26 = arith.select %24, %21, %25 : vector<16x128xi1>, vector<16x128xf32>
    %cst_18 = arith.constant dense<0xFF800000> : vector<16xf32>
    %27 = vector.multi_reduction <maximumf>, %26, %cst_18 [1] : vector<16x128xf32> to vector<16xf32>
    %28 = vector.shape_cast %27 : vector<16xf32> to vector<16x1xf32>
    %29 = vector.broadcast %28 : vector<16x1xf32> to vector<16x128xf32>
    %30 = arith.subf %26, %29 : vector<16x128xf32>
    %31 = math.exp %30 : vector<16x128xf32>
    %cst_19 = arith.constant dense<0.000000e+00> : vector<16xf32>
    %32 = vector.multi_reduction <add>, %31, %cst_19 [1] : vector<16x128xf32> to vector<16xf32>
    %33 = vector.shape_cast %32 : vector<16xf32> to vector<16x1xf32>
    %34 = math.log %33 : vector<16x1xf32>
    %35 = vector.broadcast %34 : vector<16x1xf32> to vector<16x128xf32>
    %36 = arith.subf %30, %35 : vector<16x128xf32>
    %37 = arith.truncf %36 : vector<16x128xf32> to vector<16x128xbf16>
    %c0_20 = arith.constant 0 : index
    %c0_21 = arith.constant 0 : index
    %38 = vector.load %arg8[%c0_20, %c0_21] : memref<16x128xbf16, #tpu.memory_space<vmem>>, vector<16x128xbf16>
    tpu.vector_store %arg8[%c0_20, %c0_21], %37 {strides = array<i32>} : memref<16x128xbf16, #tpu.memory_space<vmem>>, vector<16x128xbf16>,
    return
  }
  func.func @transform_0(%arg0: i32) -> (i32, i32) {
    %c0_i32 = arith.constant 0 : i32
    %c0_i32_0 = arith.constant 0 : i32
    return %arg0, %c0_i32 : i32, i32
  }
  func.func @transform_1(%arg0: i32) -> (i32, i32) {
    %c0_i32 = arith.constant 0 : i32
    %c0_i32_0 = arith.constant 0 : i32
    %c0_i32_1 = arith.constant 0 : i32
    return %c0_i32, %c0_i32_0 : i32, i32
  }
  func.func @transform_2(%arg0: i32) -> (i32, i32) {
    %c0_i32 = arith.constant 0 : i32
    %c0_i32_0 = arith.constant 0 : i32
    %c0_i32_1 = arith.constant 0 : i32
    return %c0_i32, %c0_i32_0 : i32, i32
  }
  func.func @transform_3(%arg0: i32) -> (i32, i32) {
    %c0_i32 = arith.constant 0 : i32
    %c0_i32_0 = arith.constant 0 : i32
    %c0_i32_1 = arith.constant 0 : i32
    return %c0_i32, %c0_i32_0 : i32, i32
  }
  func.func @transform_4(%arg0: i32) -> (i32, i32) {
    %c0_i32 = arith.constant 0 : i32
    %c0_i32_0 = arith.constant 0 : i32
    %c0_i32_1 = arith.constant 0 : i32
    return %c0_i32, %c0_i32_0 : i32, i32
  }
  func.func @transform_5(%arg0: i32) -> (i32, i32) {
    %c0_i32 = arith.constant 0 : i32
    %c0_i32_0 = arith.constant 0 : i32
    %c0_i32_1 = arith.constant 0 : i32
    return %c0_i32, %c0_i32_0 : i32, i32
  }
  func.func @transform_6(%arg0: i32) -> (i32, i32) {
    %c0_i32 = arith.constant 0 : i32
    %c0_i32_0 = arith.constant 0 : i32
    %c0_i32_1 = arith.constant 0 : i32
    return %c0_i32, %c0_i32_0 : i32, i32
  }
  func.func @transform_7(%arg0: i32) -> (i32, i32) {
    %c0_i32 = arith.constant 0 : i32
    %c0_i32_0 = arith.constant 0 : i32
    return %arg0, %c0_i32 : i32, i32
  }
}

</mosaic_0001>

<llo_original>
// kernel: net_forward.1
$region0: #{net_forward.1}
  #allocation0 [shape = 'u32[]', space=smem, size = 0x4, offset = 0x4, fixed_abs, tag = 'smem constant byte address 0x4 - core index']
  #allocation1 [shape = 'u32[144,128]{1,0:T(1,128)}', space=vmem, size = 0x12000, scoped, tag = 'internal scratch']
  %s0 = inlined_call_operand.vmem [shape: bf16[16,784], index: 0, kind: input, shape index: {}]
  %s1 = inlined_call_operand.hbm [shape: bf16[784,128], index: 1, kind: input, shape index: {}]
  %s2 = inlined_call_operand.vmem [shape: f32[1,128], index: 2, kind: input, shape index: {}]
  %s3 = inlined_call_operand.vmem [shape: bf16[128,128], index: 3, kind: input, shape index: {}]
  %s4 = inlined_call_operand.vmem [shape: f32[1,128], index: 4, kind: input, shape index: {}]
  %s5 = inlined_call_operand.vmem [shape: bf16[128,128], index: 5, kind: input, shape index: {}]
  %s6 = inlined_call_operand.vmem [shape: f32[1,128], index: 6, kind: input, shape index: {}]
  %s7 = inlined_call_operand.vmem [shape: bf16[16,128], index: 7, kind: output, shape index: {}]
  %s8 = sld [smem:[#allocation0]]
  $region42: #{net_forward.1} parent=0
    _
  %s10 = ssub.s32 1, %s8
  %s11 = scalar_select 0, %s10, %s8
  $region1: #{net_forward.1} parent=0
    #allocation2 [shape = 'u8[200704]{0}', space=vmem, size = 0x31000, scoped, tag = 'input window, operand 1, single buffered']
    #allocation3 [shape = 's32[1]{0}', space=sflag, size = 0x4, scoped, tag = 'scoped memory for net_forward.1']
    %12 = vsyncpa [#allocation3], 0
    // Predicated region
    $region2: #{net_forward.1} parent=1 // pred_check
      _
    $region3: #{net_forward.1} parent=1 // pred_check_branch
      %14 = sbr.rel (0) target = $region5
    $region4: #{net_forward.1} parent=1 // pred_region
      _
    $region5: #{net_forward.1} parent=1 // pred_fallthru
      _
    // Predicated region
    $region6: #{net_forward.1} parent=1 // pred_check
      _
    $region7: #{net_forward.1} parent=1 // pred_check_branch
      %16 = sbr.rel (0) target = $region9
    $region8: #{net_forward.1} parent=1 // pred_region
      %s18 = ssub.s32 6272, 6272
      %19 = vsyncadd [#allocation3], %s18
      %s20 = sshll.u32 [#allocation2], 4
      %s21 = int_to_ptr.vmem [resolvable:$true] %s20
      %26 = dma.hbm_to_vmem [thread:$0]  %s1, 6272, %s21, [#allocation3], 64, 64, 4
    $region9: #{net_forward.1} parent=1 // pred_fallthru
      _
    // Predicated region
    $region10: #{net_forward.1} parent=1 // pred_check
      _
    $region11: #{net_forward.1} parent=1 // pred_check_branch
      %28 = sbr.rel (0) target = $region13
    $region12: #{net_forward.1} parent=1 // pred_region
      _
    $region13: #{net_forward.1} parent=1 // pred_fallthru
      _
    // Predicated region
    $region14: #{net_forward.1} parent=1 // pred_check
      _
    $region15: #{net_forward.1} parent=1 // pred_check_branch
      %30 = sbr.rel (0) target = $region17
    $region16: #{net_forward.1} parent=1 // pred_region
      _
    $region17: #{net_forward.1} parent=1 // pred_fallthru
      _
    // Predicated region
    $region18: #{net_forward.1} parent=1 // pred_check
      _
    $region19: #{net_forward.1} parent=1 // pred_check_branch
      %32 = sbr.rel (0) target = $region21
    $region20: #{net_forward.1} parent=1 // pred_region
      _
    $region21: #{net_forward.1} parent=1 // pred_fallthru
      _
    // Predicated region
    $region22: #{net_forward.1} parent=1 // pred_check
      _
    $region23: #{net_forward.1} parent=1 // pred_check_branch
      %34 = sbr.rel (0) target = $region25
    $region24: #{net_forward.1} parent=1 // pred_region
      _
    $region25: #{net_forward.1} parent=1 // pred_fallthru
      _
    // Predicated region
    $region26: #{net_forward.1} parent=1 // pred_check
      _
    $region27: #{net_forward.1} parent=1 // pred_check_branch
      %36 = sbr.rel (0) target = $region29
    $region28: #{net_forward.1} parent=1 // pred_region
      _
    $region29: #{net_forward.1} parent=1 // pred_fallthru
      _
    // Predicated region
    $region30: #{net_forward.1} parent=1 // pred_check
      _
    $region31: #{net_forward.1} parent=1 // pred_check_branch
      %38 = sbr.rel (0) target = $region33
    $region32: #{net_forward.1} parent=1 // pred_region
      %39 = dma.done [#allocation3], 6272
    $region33: #{net_forward.1} parent=1 // pred_fallthru
      _
    %v41 = vld [vmem:[%s0] sm:$0xff]
    %v42 = vld [vmem:[%s0 + $0x8] sm:$0xff]
    %v43 = vld [vmem:[%s0 + $0x10] sm:$0xff]
    %v44 = vld [vmem:[%s0 + $0x18] sm:$0xf]
    %v45 = vld [vmem:[%s0 + $0x1c] sm:$0xff]
    %v46 = vld [vmem:[%s0 + $0x24] sm:$0xff]
    %v47 = vld [vmem:[%s0 + $0x2c] sm:$0xff]
    %v48 = vld [vmem:[%s0 + $0x34] sm:$0xf]
    %v49 = vld [vmem:[#allocation2] sm:$0xf]
    %v50 = vld [vmem:[#allocation2 + $0x4] sm:$0xf]
    %v51 = vld [vmem:[#allocation2 + $0x8] sm:$0xf]
    %v52 = vld [vmem:[#allocation2 + $0xc] sm:$0xf]
    %v53 = vld [vmem:[#allocation2 + $0x10] sm:$0xf]
    %v54 = vld [vmem:[#allocation2 + $0x14] sm:$0xf]
    %v55 = vld [vmem:[#allocation2 + $0x18] sm:$0xf]
    %v56 = vld [vmem:[#allocation2 + $0x1c] sm:$0xf]
    %v57 = vld [vmem:[#allocation2 + $0x20] sm:$0xf]
    %v58 = vld [vmem:[#allocation2 + $0x24] sm:$0xf]
    %v59 = vld [vmem:[#allocation2 + $0x28] sm:$0xf]
    %v60 = vld [vmem:[#allocation2 + $0x2c] sm:$0xf]
    %v61 = vld [vmem:[#allocation2 + $0x30] sm:$0xf]
    %v62 = vld [vmem:[#allocation2 + $0x34] sm:$0xf]
    %v63 = vld [vmem:[#allocation2 + $0x38] sm:$0xf]
    %v64 = vld [vmem:[#allocation2 + $0x3c] sm:$0xf]
    %v65 = vld [vmem:[#allocation2 + $0x40] sm:$0xf]
    %v66 = vld [vmem:[#allocation2 + $0x44] sm:$0xf]
    %v67 = vld [vmem:[#allocation2 + $0x48] sm:$0xf]
    %v68 = vld [vmem:[#allocation2 + $0x4c] sm:$0xf]
    %v69 = vld [vmem:[#allocation2 + $0x50] sm:$0xf]
    %v70 = vld [vmem:[#allocation2 + $0x54] sm:$0xf]
    %v71 = vld [vmem:[#allocation2 + $0x58] sm:$0xf]
    %v72 = vld [vmem:[#allocation2 + $0x5c] sm:$0xf]
    %v73 = vld [vmem:[#allocation2 + $0x60] sm:$0xf]
    %v74 = vld [vmem:[#allocation2 + $0x64] sm:$0xf]
    %v75 = vld [vmem:[#allocation2 + $0x68] sm:$0xf]
    %v76 = vld [vmem:[#allocation2 + $0x6c] sm:$0xf]
    %v77 = vld [vmem:[#allocation2 + $0x70] sm:$0xf]
    %v78 = vld [vmem:[#allocation2 + $0x74] sm:$0xf]
    %v79 = vld [vmem:[#allocation2 + $0x78] sm:$0xf]
    %v80 = vld [vmem:[#allocation2 + $0x7c] sm:$0xf]
    %v81 = vld [vmem:[#allocation2 + $0x80] sm:$0xf]
    %v82 = vld [vmem:[#allocation2 + $0x84] sm:$0xf]
    %v83 = vld [vmem:[#allocation2 + $0x88] sm:$0xf]
    %v84 = vld [vmem:[#allocation2 + $0x8c] sm:$0xf]
    %v85 = vld [vmem:[#allocation2 + $0x90] sm:$0xf]
    %v86 = vld [vmem:[#allocation2 + $0x94] sm:$0xf]
    %v87 = vld [vmem:[#allocation2 + $0x98] sm:$0xf]
    %v88 = vld [vmem:[#allocation2 + $0x9c] sm:$0xf]
    %v89 = vld [vmem:[#allocation2 + $0xa0] sm:$0xf]
    %v90 = vld [vmem:[#allocation2 + $0xa4] sm:$0xf]
    %v91 = vld [vmem:[#allocation2 + $0xa8] sm:$0xf]
    %v92 = vld [vmem:[#allocation2 + $0xac] sm:$0xf]
    %v93 = vld [vmem:[#allocation2 + $0xb0] sm:$0xf]
    %v94 = vld [vmem:[#allocation2 + $0xb4] sm:$0xf]
    %v95 = vld [vmem:[#allocation2 + $0xb8] sm:$0xf]
    %v96 = vld [vmem:[#allocation2 + $0xbc] sm:$0xf]
    %v97 = vld [vmem:[#allocation2 + $0xc0] sm:$0xf]
    %v98 = vld [vmem:[#allocation2 + $0xc4] sm:$0xf]
    %v99 = vld [vmem:[#allocation2 + $0xc8] sm:$0xf]
    %v100 = vld [vmem:[#allocation2 + $0xcc] sm:$0xf]
    %v101 = vld [vmem:[#allocation2 + $0xd0] sm:$0xf]
    %v102 = vld [vmem:[#allocation2 + $0xd4] sm:$0xf]
    %v103 = vld [vmem:[#allocation2 + $0xd8] sm:$0xf]
    %v104 = vld [vmem:[#allocation2 + $0xdc] sm:$0xf]
    %v105 = vld [vmem:[#allocation2 + $0xe0] sm:$0xf]
    %v106 = vld [vmem:[#allocation2 + $0xe4] sm:$0xf]
    %v107 = vld [vmem:[#allocation2 + $0xe8] sm:$0xf]
    %v108 = vld [vmem:[#allocation2 + $0xec] sm:$0xf]
    %v109 = vld [vmem:[#allocation2 + $0xf0] sm:$0xf]
    %v110 = vld [vmem:[#allocation2 + $0xf4] sm:$0xf]
    %v111 = vld [vmem:[#allocation2 + $0xf8] sm:$0xf]
    %v112 = vld [vmem:[#allocation2 + $0xfc] sm:$0xf]
    %v113 = vld [vmem:[#allocation2 + $0x100] sm:$0xf]
    %v114 = vld [vmem:[#allocation2 + $0x104] sm:$0xf]
    %v115 = vld [vmem:[#allocation2 + $0x108] sm:$0xf]
    %v116 = vld [vmem:[#allocation2 + $0x10c] sm:$0xf]
    %v117 = vld [vmem:[#allocation2 + $0x110] sm:$0xf]
    %v118 = vld [vmem:[#allocation2 + $0x114] sm:$0xf]
    %v119 = vld [vmem:[#allocation2 + $0x118] sm:$0xf]
    %v120 = vld [vmem:[#allocation2 + $0x11c] sm:$0xf]
    %v121 = vld [vmem:[#allocation2 + $0x120] sm:$0xf]
    %v122 = vld [vmem:[#allocation2 + $0x124] sm:$0xf]
    %v123 = vld [vmem:[#allocation2 + $0x128] sm:$0xf]
    %v124 = vld [vmem:[#allocation2 + $0x12c] sm:$0xf]
    %v125 = vld [vmem:[#allocation2 + $0x130] sm:$0xf]
    %v126 = vld [vmem:[#allocation2 + $0x134] sm:$0xf]
    %v127 = vld [vmem:[#allocation2 + $0x138] sm:$0xf]
    %v128 = vld [vmem:[#allocation2 + $0x13c] sm:$0xf]
    %v129 = vld [vmem:[#allocation2 + $0x140] sm:$0xf]
    %v130 = vld [vmem:[#allocation2 + $0x144] sm:$0xf]
    %v131 = vld [vmem:[#allocation2 + $0x148] sm:$0xf]
    %v132 = vld [vmem:[#allocation2 + $0x14c] sm:$0xf]
    %v133 = vld [vmem:[#allocation2 + $0x150] sm:$0xf]
    %v134 = vld [vmem:[#allocation2 + $0x154] sm:$0xf]
    %v135 = vld [vmem:[#allocation2 + $0x158] sm:$0xf]
    %v136 = vld [vmem:[#allocation2 + $0x15c] sm:$0xf]
    %v137 = vld [vmem:[#allocation2 + $0x160] sm:$0xf]
    %v138 = vld [vmem:[#allocation2 + $0x164] sm:$0xf]
    %v139 = vld [vmem:[#allocation2 + $0x168] sm:$0xf]
    %v140 = vld [vmem:[#allocation2 + $0x16c] sm:$0xf]
    %v141 = vld [vmem:[#allocation2 + $0x170] sm:$0xf]
    %v142 = vld [vmem:[#allocation2 + $0x174] sm:$0xf]
    %v143 = vld [vmem:[#allocation2 + $0x178] sm:$0xf]
    %v144 = vld [vmem:[#allocation2 + $0x17c] sm:$0xf]
    %v145 = vld [vmem:[#allocation2 + $0x180] sm:$0xf]
    %v146 = vld [vmem:[#allocation2 + $0x184] sm:$0xf]
    %v147 = vld [vmem:[%s2] sm:$0x1]
    %v149 = vlaneseq
    %v150 = vshrl.u32 %v149, 7
    %v151 = vsub.s32 0, %v150
    %v152 = vrot.slane %v147, %v151
    %v162 = vunpack.c.l.b16 %v41
    %v163 = vunpack.c.h.b16 %v41
    %v164 = vunpack.c.l.b16 %v42
    %v165 = vunpack.c.h.b16 %v42
    %v166 = vunpack.c.l.b16 %v43
    %v167 = vunpack.c.h.b16 %v43
    %v168 = vunpack.c.l.b16 %v44
    %v169 = vunpack.c.l.b16 %v45
    %v170 = vunpack.c.h.b16 %v45
    %v171 = vunpack.c.l.b16 %v46
    %v172 = vunpack.c.h.b16 %v46
    %v173 = vunpack.c.l.b16 %v47
    %v174 = vunpack.c.h.b16 %v47
    %v175 = vunpack.c.l.b16 %v48
    %v176 = vpack.c.b16 %v169, %v162
    %v177 = vpack.c.b16 %v170, %v163
    %v178 = vpack.c.b16 %v171, %v164
    %v179 = vpack.c.b16 %v172, %v165
    %v180 = vpack.c.b16 %v173, %v166
    %v181 = vpack.c.b16 %v174, %v167
    %v182 = vpack.c.b16 %v175, %v168
    %v287 = vunpack.c.l.b16 %v49
    %v288 = vunpack.c.l.b16 %v50
    %v289 = vunpack.c.l.b16 %v51
    %v290 = vunpack.c.l.b16 %v52
    %v291 = vunpack.c.l.b16 %v53
    %v292 = vunpack.c.l.b16 %v54
    %v293 = vunpack.c.l.b16 %v55
    %v294 = vunpack.c.l.b16 %v56
    %v295 = vunpack.c.l.b16 %v57
    %v296 = vunpack.c.l.b16 %v58
    %v297 = vunpack.c.l.b16 %v59
    %v298 = vunpack.c.l.b16 %v60
    %v299 = vunpack.c.l.b16 %v61
    %v300 = vunpack.c.l.b16 %v62
    %v301 = vunpack.c.l.b16 %v63
    %v302 = vunpack.c.l.b16 %v64
    %v303 = vunpack.c.l.b16 %v65
    %v304 = vunpack.c.l.b16 %v66
    %v305 = vunpack.c.l.b16 %v67
    %v306 = vunpack.c.l.b16 %v68
    %v307 = vunpack.c.l.b16 %v69
    %v308 = vunpack.c.l.b16 %v70
    %v309 = vunpack.c.l.b16 %v71
    %v310 = vunpack.c.l.b16 %v72
    %v311 = vunpack.c.l.b16 %v73
    %v312 = vunpack.c.l.b16 %v74
    %v313 = vunpack.c.l.b16 %v75
    %v314 = vunpack.c.l.b16 %v76
    %v315 = vunpack.c.l.b16 %v77
    %v316 = vunpack.c.l.b16 %v78
    %v317 = vunpack.c.l.b16 %v79
    %v318 = vunpack.c.l.b16 %v80
    %v319 = vunpack.c.l.b16 %v81
    %v320 = vunpack.c.l.b16 %v82
    %v321 = vunpack.c.l.b16 %v83
    %v322 = vunpack.c.l.b16 %v84
    %v323 = vunpack.c.l.b16 %v85
    %v324 = vunpack.c.l.b16 %v86
    %v325 = vunpack.c.l.b16 %v87
    %v326 = vunpack.c.l.b16 %v88
    %v327 = vunpack.c.l.b16 %v89
    %v328 = vunpack.c.l.b16 %v90
    %v329 = vunpack.c.l.b16 %v91
    %v330 = vunpack.c.l.b16 %v92
    %v331 = vunpack.c.l.b16 %v93
    %v332 = vunpack.c.l.b16 %v94
    %v333 = vunpack.c.l.b16 %v95
    %v334 = vunpack.c.l.b16 %v96
    %v335 = vunpack.c.l.b16 %v97
    %v336 = vunpack.c.l.b16 %v98
    %v337 = vunpack.c.l.b16 %v99
    %v338 = vunpack.c.l.b16 %v100
    %v339 = vunpack.c.l.b16 %v101
    %v340 = vunpack.c.l.b16 %v102
    %v341 = vunpack.c.l.b16 %v103
    %v342 = vunpack.c.l.b16 %v104
    %v343 = vunpack.c.l.b16 %v105
    %v344 = vunpack.c.l.b16 %v106
    %v345 = vunpack.c.l.b16 %v107
    %v346 = vunpack.c.l.b16 %v108
    %v347 = vunpack.c.l.b16 %v109
    %v348 = vunpack.c.l.b16 %v110
    %v349 = vunpack.c.l.b16 %v111
    %v350 = vunpack.c.l.b16 %v112
    %v351 = vunpack.c.l.b16 %v113
    %v352 = vunpack.c.l.b16 %v114
    %v353 = vunpack.c.l.b16 %v115
    %v354 = vunpack.c.l.b16 %v116
    %v355 = vunpack.c.l.b16 %v117
    %v356 = vunpack.c.l.b16 %v118
    %v357 = vunpack.c.l.b16 %v119
    %v358 = vunpack.c.l.b16 %v120
    %v359 = vunpack.c.l.b16 %v121
    %v360 = vunpack.c.l.b16 %v122
    %v361 = vunpack.c.l.b16 %v123
    %v362 = vunpack.c.l.b16 %v124
    %v363 = vunpack.c.l.b16 %v125
    %v364 = vunpack.c.l.b16 %v126
    %v365 = vunpack.c.l.b16 %v127
    %v366 = vunpack.c.l.b16 %v128
    %v367 = vunpack.c.l.b16 %v129
    %v368 = vunpack.c.l.b16 %v130
    %v369 = vunpack.c.l.b16 %v131
    %v370 = vunpack.c.l.b16 %v132
    %v371 = vunpack.c.l.b16 %v133
    %v372 = vunpack.c.l.b16 %v134
    %v373 = vunpack.c.l.b16 %v135
    %v374 = vunpack.c.l.b16 %v136
    %v375 = vunpack.c.l.b16 %v137
    %v376 = vunpack.c.l.b16 %v138
    %v377 = vunpack.c.l.b16 %v139
    %v378 = vunpack.c.l.b16 %v140
    %v379 = vunpack.c.l.b16 %v141
    %v380 = vunpack.c.l.b16 %v142
    %v381 = vunpack.c.l.b16 %v143
    %v382 = vunpack.c.l.b16 %v144
    %v383 = vunpack.c.l.b16 %v145
    %v384 = vunpack.c.l.b16 %v146
    %v385 = vpack.c.b16 %v288, %v287
    %v386 = vpack.c.b16 %v290, %v289
    %v387 = vpack.c.b16 %v292, %v291
    %v388 = vpack.c.b16 %v294, %v293
    %v389 = vpack.c.b16 %v296, %v295
    %v390 = vpack.c.b16 %v298, %v297
    %v391 = vpack.c.b16 %v300, %v299
    %v392 = vpack.c.b16 %v302, %v301
    %v393 = vpack.c.b16 %v304, %v303
    %v394 = vpack.c.b16 %v306, %v305
    %v395 = vpack.c.b16 %v308, %v307
    %v396 = vpack.c.b16 %v310, %v309
    %v397 = vpack.c.b16 %v312, %v311
    %v398 = vpack.c.b16 %v314, %v313
    %v399 = vpack.c.b16 %v316, %v315
    %v400 = vpack.c.b16 %v318, %v317
    %v401 = vpack.c.b16 %v320, %v319
    %v402 = vpack.c.b16 %v322, %v321
    %v403 = vpack.c.b16 %v324, %v323
    %v404 = vpack.c.b16 %v326, %v325
    %v405 = vpack.c.b16 %v328, %v327
    %v406 = vpack.c.b16 %v330, %v329
    %v407 = vpack.c.b16 %v332, %v331
    %v408 = vpack.c.b16 %v334, %v333
    %v409 = vpack.c.b16 %v336, %v335
    %v410 = vpack.c.b16 %v338, %v337
    %v411 = vpack.c.b16 %v340, %v339
    %v412 = vpack.c.b16 %v342, %v341
    %v413 = vpack.c.b16 %v344, %v343
    %v414 = vpack.c.b16 %v346, %v345
    %v415 = vpack.c.b16 %v348, %v347
    %v416 = vpack.c.b16 %v350, %v349
    %v417 = vpack.c.b16 %v352, %v351
    %v418 = vpack.c.b16 %v354, %v353
    %v419 = vpack.c.b16 %v356, %v355
    %v420 = vpack.c.b16 %v358, %v357
    %v421 = vpack.c.b16 %v360, %v359
    %v422 = vpack.c.b16 %v362, %v361
    %v423 = vpack.c.b16 %v364, %v363
    %v424 = vpack.c.b16 %v366, %v365
    %v425 = vpack.c.b16 %v368, %v367
    %v426 = vpack.c.b16 %v370, %v369
    %v427 = vpack.c.b16 %v372, %v371
    %v428 = vpack.c.b16 %v374, %v373
    %v429 = vpack.c.b16 %v376, %v375
    %v430 = vpack.c.b16 %v378, %v377
    %v431 = vpack.c.b16 %v380, %v379
    %v432 = vpack.c.b16 %v382, %v381
    %v433 = vpack.c.b16 %v384, %v383
    %vm483 = vcmask 130048
    %v485 = vsel %vm483, %v182, 0
    %487 = vmatprep.subr.bf16.mxu0 0
    %488 = vmatpush1.bf16.msra.mxu0 %v385
    %489 = vmatprep.subr.bf16.mxu0 0
    %490 = vmatpush1.bf16.msra.mxu0 %v386
    %491 = vmatprep.subr.bf16.mxu0 0
    %492 = vmatpush1.bf16.msra.mxu0 %v387
    %493 = vmatprep.subr.bf16.mxu0 0
    %494 = vmatpush1.bf16.msra.mxu0 %v388
    %495 = vmatprep.subr.bf16.mxu0 0
    %496 = vmatpush1.bf16.msra.mxu0 %v389
    %497 = vmatprep.subr.bf16.mxu0 0
    %498 = vmatpush1.bf16.msra.mxu0 %v390
    %499 = vmatprep.subr.bf16.mxu0 0
    %500 = vmatpush1.bf16.msra.mxu0 %v391
    %501 = vmatprep.subr.bf16.mxu0 0
    %502 = vmatpush1.bf16.msra.mxu0 %v392
    %503 = vmatprep.subr.bf16.mxu0 0
    %504 = vmatpush1.bf16.msra.mxu0 %v393
    %505 = vmatprep.subr.bf16.mxu0 0
    %506 = vmatpush1.bf16.msra.mxu0 %v394
    %507 = vmatprep.subr.bf16.mxu0 0
    %508 = vmatpush1.bf16.msra.mxu0 %v395
    %509 = vmatprep.subr.bf16.mxu0 0
    %510 = vmatpush1.bf16.msra.mxu0 %v396
    %511 = vmatprep.subr.bf16.mxu0 0
    %512 = vmatpush1.bf16.msra.mxu0 %v397
    %513 = vmatprep.subr.bf16.mxu0 0
    %514 = vmatpush1.bf16.msra.mxu0 %v398
    %515 = vmatprep.subr.bf16.mxu0 0
    %516 = vmatpush1.bf16.msra.mxu0 %v399
    %517 = vmatprep.subr.bf16.mxu0 0
    %518 = vmatpush1.bf16.msra.mxu0 %v400
    %519 = vmatprep.mubr.bf16.mxu0 %v177
    %520 = vmatmul.mubr.bf16.gmra.mrb[0].mxu0 %v176
    %v521 = vpop.f32.mrb[0].mxu0
    %v522 = vadd.f32 %v152, %v521
    %v523 = vpop.f32.mrb[0].mxu0
    %v524 = vpop.f32.mrb[0].mxu0
    %v525 = vadd.f32 %v152, %v524
    %v526 = vpop.f32.mrb[0].mxu0
    %527 = vdwg.mxu0
    %528 = vmatprep.subr.bf16.mxu0 0
    %529 = vmatpush1.bf16.msra.mxu0 %v401
    %530 = vmatprep.subr.bf16.mxu0 0
    %531 = vmatpush1.bf16.msra.mxu0 %v402
    %532 = vmatprep.subr.bf16.mxu0 0
    %533 = vmatpush1.bf16.msra.mxu0 %v403
    %534 = vmatprep.subr.bf16.mxu0 0
    %535 = vmatpush1.bf16.msra.mxu0 %v404
    %536 = vmatprep.subr.bf16.mxu0 0
    %537 = vmatpush1.bf16.msra.mxu0 %v405
    %538 = vmatprep.subr.bf16.mxu0 0
    %539 = vmatpush1.bf16.msra.mxu0 %v406
    %540 = vmatprep.subr.bf16.mxu0 0
    %541 = vmatpush1.bf16.msra.mxu0 %v407
    %542 = vmatprep.subr.bf16.mxu0 0
    %543 = vmatpush1.bf16.msra.mxu0 %v408
    %544 = vmatprep.subr.bf16.mxu0 0
    %545 = vmatpush1.bf16.msra.mxu0 %v409
    %546 = vmatprep.subr.bf16.mxu0 0
    %547 = vmatpush1.bf16.msra.mxu0 %v410
    %548 = vmatprep.subr.bf16.mxu0 0
    %549 = vmatpush1.bf16.msra.mxu0 %v411
    %550 = vmatprep.subr.bf16.mxu0 0
    %551 = vmatpush1.bf16.msra.mxu0 %v412
    %552 = vmatprep.subr.bf16.mxu0 0
    %553 = vmatpush1.bf16.msra.mxu0 %v413
    %554 = vmatprep.subr.bf16.mxu0 0
    %555 = vmatpush1.bf16.msra.mxu0 %v414
    %556 = vmatprep.subr.bf16.mxu0 0
    %557 = vmatpush1.bf16.msra.mxu0 %v415
    %558 = vmatprep.subr.bf16.mxu0 0
    %559 = vmatpush1.bf16.msra.mxu0 %v416
    %560 = vmatprep.mubr.bf16.mxu0 %v179
    %561 = vmatmul.mubr.bf16.gmra.mrb[0].mxu0 %v178
    %v562 = vpop.f32.mrb[0].mxu0
    %v563 = vadd.f32 %v522, %v562
    %v564 = vpop.f32.mrb[0].mxu0
    %v565 = vpop.f32.mrb[0].mxu0
    %v566 = vadd.f32 %v525, %v565
    %v567 = vpop.f32.mrb[0].mxu0
    %568 = vdwg.mxu0
    %569 = vmatprep.subr.bf16.mxu0 0
    %570 = vmatpush1.bf16.msra.mxu0 %v417
    %571 = vmatprep.subr.bf16.mxu0 0
    %572 = vmatpush1.bf16.msra.mxu0 %v418
    %573 = vmatprep.subr.bf16.mxu0 0
    %574 = vmatpush1.bf16.msra.mxu0 %v419
    %575 = vmatprep.subr.bf16.mxu0 0
    %576 = vmatpush1.bf16.msra.mxu0 %v420
    %577 = vmatprep.subr.bf16.mxu0 0
    %578 = vmatpush1.bf16.msra.mxu0 %v421
    %579 = vmatprep.subr.bf16.mxu0 0
    %580 = vmatpush1.bf16.msra.mxu0 %v422
    %581 = vmatprep.subr.bf16.mxu0 0
    %582 = vmatpush1.bf16.msra.mxu0 %v423
    %583 = vmatprep.subr.bf16.mxu0 0
    %584 = vmatpush1.bf16.msra.mxu0 %v424
    %585 = vmatprep.subr.bf16.mxu0 0
    %586 = vmatpush1.bf16.msra.mxu0 %v425
    %587 = vmatprep.subr.bf16.mxu0 0
    %588 = vmatpush1.bf16.msra.mxu0 %v426
    %589 = vmatprep.subr.bf16.mxu0 0
    %590 = vmatpush1.bf16.msra.mxu0 %v427
    %591 = vmatprep.subr.bf16.mxu0 0
    %592 = vmatpush1.bf16.msra.mxu0 %v428
    %593 = vmatprep.subr.bf16.mxu0 0
    %594 = vmatpush1.bf16.msra.mxu0 %v429
    %595 = vmatprep.subr.bf16.mxu0 0
    %596 = vmatpush1.bf16.msra.mxu0 %v430
    %597 = vmatprep.subr.bf16.mxu0 0
    %598 = vmatpush1.bf16.msra.mxu0 %v431
    %599 = vmatprep.subr.bf16.mxu0 0
    %600 = vmatpush1.bf16.msra.mxu0 %v432
    %601 = vmatprep.mubr.bf16.mxu0 %v181
    %602 = vmatmul.mubr.bf16.gmra.mrb[0].mxu0 %v180
    %v603 = vpop.f32.mrb[0].mxu0
    %v604 = vadd.f32 %v563, %v603
    %v605 = vpop.f32.mrb[0].mxu0
    %v606 = vpop.f32.mrb[0].mxu0
    %v607 = vadd.f32 %v566, %v606
    %v608 = vpop.f32.mrb[0].mxu0
    %609 = vdwg.mxu0
    %610 = vmatprep.subr.bf16.mxu0 0
    %611 = vmatpush1.bf16.msra.mxu0 %v433
    %612 = vmatprep.subr.bf16.mxu0 0
    %613 = vmatpush1.bf16.msra.mxu0 0
    %614 = vmatprep.subr.bf16.mxu0 0
    %615 = vmatpush1.bf16.msra.mxu0 0
    %616 = vmatprep.subr.bf16.mxu0 0
    %617 = vmatpush1.bf16.msra.mxu0 0
    %618 = vmatprep.subr.bf16.mxu0 0
    %619 = vmatpush1.bf16.msra.mxu0 0
    %620 = vmatprep.subr.bf16.mxu0 0
    %621 = vmatpush1.bf16.msra.mxu0 0
    %622 = vmatprep.subr.bf16.mxu0 0
    %623 = vmatpush1.bf16.msra.mxu0 0
    %624 = vmatprep.subr.bf16.mxu0 0
    %625 = vmatpush1.bf16.msra.mxu0 0
    %626 = vmatprep.subr.bf16.mxu0 0
    %627 = vmatpush1.bf16.msra.mxu0 0
    %628 = vmatprep.subr.bf16.mxu0 0
    %629 = vmatpush1.bf16.msra.mxu0 0
    %630 = vmatprep.subr.bf16.mxu0 0
    %631 = vmatpush1.bf16.msra.mxu0 0
    %632 = vmatprep.subr.bf16.mxu0 0
    %633 = vmatpush1.bf16.msra.mxu0 0
    %634 = vmatprep.subr.bf16.mxu0 0
    %635 = vmatpush1.bf16.msra.mxu0 0
    %636 = vmatprep.subr.bf16.mxu0 0
    %637 = vmatpush1.bf16.msra.mxu0 0
    %638 = vmatprep.subr.bf16.mxu0 0
    %639 = vmatpush1.bf16.msra.mxu0 0
    %640 = vmatprep.subr.bf16.mxu0 0
    %641 = vmatpush1.bf16.msra.mxu0 0
    %642 = vmatprep.mubr.bf16.mxu0 0
    %643 = vmatmul.mubr.bf16.gmra.mrb[0].mxu0 %v485
    %v644 = vpop.f32.mrb[0].mxu0
    %v645 = vadd.f32 %v604, %v644
    %v646 = vpop.f32.mrb[0].mxu0
    %v647 = vpop.f32.mrb[0].mxu0
    %v648 = vadd.f32 %v607, %v647
    %v649 = vpop.f32.mrb[0].mxu0
    %650 = vdwg.mxu0
    %v651 = vmax.f32 %v645, 0.0
    %v652 = vmax.f32 %v648, 0.0
    %v653 = vpack.c.bf16 %v652, %v651
    %v654 = vld [vmem:[%s3] sm:$0xf]
    %v655 = vld [vmem:[%s3 + $0x4] sm:$0xf]
    %v656 = vld [vmem:[%s3 + $0x8] sm:$0xf]
    %v657 = vld [vmem:[%s3 + $0xc] sm:$0xf]
    %v658 = vld [vmem:[%s3 + $0x10] sm:$0xf]
    %v659 = vld [vmem:[%s3 + $0x14] sm:$0xf]
    %v660 = vld [vmem:[%s3 + $0x18] sm:$0xf]
    %v661 = vld [vmem:[%s3 + $0x1c] sm:$0xf]
    %v662 = vld [vmem:[%s3 + $0x20] sm:$0xf]
    %v663 = vld [vmem:[%s3 + $0x24] sm:$0xf]
    %v664 = vld [vmem:[%s3 + $0x28] sm:$0xf]
    %v665 = vld [vmem:[%s3 + $0x2c] sm:$0xf]
    %v666 = vld [vmem:[%s3 + $0x30] sm:$0xf]
    %v667 = vld [vmem:[%s3 + $0x34] sm:$0xf]
    %v668 = vld [vmem:[%s3 + $0x38] sm:$0xf]
    %v669 = vld [vmem:[%s3 + $0x3c] sm:$0xf]
    %v670 = vld [vmem:[%s4] sm:$0x1]
    %v672 = vlaneseq
    %v673 = vshrl.u32 %v672, 7
    %v674 = vsub.s32 0, %v673
    %v675 = vrot.slane %v670, %v674
    %v693 = vunpack.c.l.b16 %v654
    %v694 = vunpack.c.l.b16 %v655
    %v695 = vunpack.c.l.b16 %v656
    %v696 = vunpack.c.l.b16 %v657
    %v697 = vunpack.c.l.b16 %v658
    %v698 = vunpack.c.l.b16 %v659
    %v699 = vunpack.c.l.b16 %v660
    %v700 = vunpack.c.l.b16 %v661
    %v701 = vunpack.c.l.b16 %v662
    %v702 = vunpack.c.l.b16 %v663
    %v703 = vunpack.c.l.b16 %v664
    %v704 = vunpack.c.l.b16 %v665
    %v705 = vunpack.c.l.b16 %v666
    %v706 = vunpack.c.l.b16 %v667
    %v707 = vunpack.c.l.b16 %v668
    %v708 = vunpack.c.l.b16 %v669
    %v709 = vpack.c.b16 %v694, %v693
    %v710 = vpack.c.b16 %v696, %v695
    %v711 = vpack.c.b16 %v698, %v697
    %v712 = vpack.c.b16 %v700, %v699
    %v713 = vpack.c.b16 %v702, %v701
    %v714 = vpack.c.b16 %v704, %v703
    %v715 = vpack.c.b16 %v706, %v705
    %v716 = vpack.c.b16 %v708, %v707
    %725 = vmatprep.subr.bf16.mxu0 0
    %726 = vmatpush1.bf16.msra.mxu0 %v709
    %727 = vmatprep.subr.bf16.mxu0 0
    %728 = vmatpush1.bf16.msra.mxu0 %v710
    %729 = vmatprep.subr.bf16.mxu0 0
    %730 = vmatpush1.bf16.msra.mxu0 %v711
    %731 = vmatprep.subr.bf16.mxu0 0
    %732 = vmatpush1.bf16.msra.mxu0 %v712
    %733 = vmatprep.subr.bf16.mxu0 0
    %734 = vmatpush1.bf16.msra.mxu0 %v713
    %735 = vmatprep.subr.bf16.mxu0 0
    %736 = vmatpush1.bf16.msra.mxu0 %v714
    %737 = vmatprep.subr.bf16.mxu0 0
    %738 = vmatpush1.bf16.msra.mxu0 %v715
    %739 = vmatprep.subr.bf16.mxu0 0
    %740 = vmatpush1.bf16.msra.mxu0 %v716
    %741 = vmatprep.subr.bf16.mxu0 0
    %742 = vmatpush1.bf16.msra.mxu0 0
    %743 = vmatprep.subr.bf16.mxu0 0
    %744 = vmatpush1.bf16.msra.mxu0 0
    %745 = vmatprep.subr.bf16.mxu0 0
    %746 = vmatpush1.bf16.msra.mxu0 0
    %747 = vmatprep.subr.bf16.mxu0 0
    %748 = vmatpush1.bf16.msra.mxu0 0
    %749 = vmatprep.subr.bf16.mxu0 0
    %750 = vmatpush1.bf16.msra.mxu0 0
    %751 = vmatprep.subr.bf16.mxu0 0
    %752 = vmatpush1.bf16.msra.mxu0 0
    %753 = vmatprep.subr.bf16.mxu0 0
    %754 = vmatpush1.bf16.msra.mxu0 0
    %755 = vmatprep.subr.bf16.mxu0 0
    %756 = vmatpush1.bf16.msra.mxu0 0
    %757 = vmatprep.mubr.bf16.mxu0 0
    %758 = vmatmul.mubr.bf16.gmra.mrb[0].mxu0 %v653
    %v759 = vpop.f32.mrb[0].mxu0
    %v760 = vadd.f32 %v675, %v759
    %v761 = vpop.f32.mrb[0].mxu0
    %v762 = vpop.f32.mrb[0].mxu0
    %v763 = vadd.f32 %v675, %v762
    %v764 = vpop.f32.mrb[0].mxu0
    %765 = vdwg.mxu0
    %v766 = vmax.f32 %v760, 0.0
    %v767 = vmax.f32 %v763, 0.0
    %v768 = vpack.c.bf16 %v767, %v766
    %v769 = vld [vmem:[%s5] sm:$0xf]
    %v770 = vld [vmem:[%s5 + $0x4] sm:$0xf]
    %v771 = vld [vmem:[%s5 + $0x8] sm:$0xf]
    %v772 = vld [vmem:[%s5 + $0xc] sm:$0xf]
    %v773 = vld [vmem:[%s5 + $0x10] sm:$0xf]
    %v774 = vld [vmem:[%s5 + $0x14] sm:$0xf]
    %v775 = vld [vmem:[%s5 + $0x18] sm:$0xf]
    %v776 = vld [vmem:[%s5 + $0x1c] sm:$0xf]
    %v777 = vld [vmem:[%s5 + $0x20] sm:$0xf]
    %v778 = vld [vmem:[%s5 + $0x24] sm:$0xf]
    %v779 = vld [vmem:[%s5 + $0x28] sm:$0xf]
    %v780 = vld [vmem:[%s5 + $0x2c] sm:$0xf]
    %v781 = vld [vmem:[%s5 + $0x30] sm:$0xf]
    %v782 = vld [vmem:[%s5 + $0x34] sm:$0xf]
    %v783 = vld [vmem:[%s5 + $0x38] sm:$0xf]
    %v784 = vld [vmem:[%s5 + $0x3c] sm:$0xf]
    %v785 = vld [vmem:[%s6] sm:$0x1]
    %v787 = vlaneseq
    %v788 = vshrl.u32 %v787, 7
    %v789 = vsub.s32 0, %v788
    %v790 = vrot.slane %v785, %v789
    %v808 = vunpack.c.l.b16 %v769
    %v809 = vunpack.c.l.b16 %v770
    %v810 = vunpack.c.l.b16 %v771
    %v811 = vunpack.c.l.b16 %v772
    %v812 = vunpack.c.l.b16 %v773
    %v813 = vunpack.c.l.b16 %v774
    %v814 = vunpack.c.l.b16 %v775
    %v815 = vunpack.c.l.b16 %v776
    %v816 = vunpack.c.l.b16 %v777
    %v817 = vunpack.c.l.b16 %v778
    %v818 = vunpack.c.l.b16 %v779
    %v819 = vunpack.c.l.b16 %v780
    %v820 = vunpack.c.l.b16 %v781
    %v821 = vunpack.c.l.b16 %v782
    %v822 = vunpack.c.l.b16 %v783
    %v823 = vunpack.c.l.b16 %v784
    %v824 = vpack.c.b16 %v809, %v808
    %v825 = vpack.c.b16 %v811, %v810
    %v826 = vpack.c.b16 %v813, %v812
    %v827 = vpack.c.b16 %v815, %v814
    %v828 = vpack.c.b16 %v817, %v816
    %v829 = vpack.c.b16 %v819, %v818
    %v830 = vpack.c.b16 %v821, %v820
    %v831 = vpack.c.b16 %v823, %v822
    %840 = vmatprep.subr.bf16.mxu0 0
    %841 = vmatpush1.bf16.msra.mxu0 %v824
    %842 = vmatprep.subr.bf16.mxu0 0
    %843 = vmatpush1.bf16.msra.mxu0 %v825
    %844 = vmatprep.subr.bf16.mxu0 0
    %845 = vmatpush1.bf16.msra.mxu0 %v826
    %846 = vmatprep.subr.bf16.mxu0 0
    %847 = vmatpush1.bf16.msra.mxu0 %v827
    %848 = vmatprep.subr.bf16.mxu0 0
    %849 = vmatpush1.bf16.msra.mxu0 %v828
    %850 = vmatprep.subr.bf16.mxu0 0
    %851 = vmatpush1.bf16.msra.mxu0 %v829
    %852 = vmatprep.subr.bf16.mxu0 0
    %853 = vmatpush1.bf16.msra.mxu0 %v830
    %854 = vmatprep.subr.bf16.mxu0 0
    %855 = vmatpush1.bf16.msra.mxu0 %v831
    %856 = vmatprep.subr.bf16.mxu0 0
    %857 = vmatpush1.bf16.msra.mxu0 0
    %858 = vmatprep.subr.bf16.mxu0 0
    %859 = vmatpush1.bf16.msra.mxu0 0
    %860 = vmatprep.subr.bf16.mxu0 0
    %861 = vmatpush1.bf16.msra.mxu0 0
    %862 = vmatprep.subr.bf16.mxu0 0
    %863 = vmatpush1.bf16.msra.mxu0 0
    %864 = vmatprep.subr.bf16.mxu0 0
    %865 = vmatpush1.bf16.msra.mxu0 0
    %866 = vmatprep.subr.bf16.mxu0 0
    %867 = vmatpush1.bf16.msra.mxu0 0
    %868 = vmatprep.subr.bf16.mxu0 0
    %869 = vmatpush1.bf16.msra.mxu0 0
    %870 = vmatprep.subr.bf16.mxu0 0
    %871 = vmatpush1.bf16.msra.mxu0 0
    %872 = vmatprep.mubr.bf16.mxu0 0
    %873 = vmatmul.mubr.bf16.gmra.mrb[0].mxu0 %v768
    %v874 = vpop.f32.mrb[0].mxu0
    %v875 = vadd.f32 %v790, %v874
    %v876 = vpop.f32.mrb[0].mxu0
    %v877 = vpop.f32.mrb[0].mxu0
    %v878 = vadd.f32 %v790, %v877
    %v879 = vpop.f32.mrb[0].mxu0
    %880 = vdwg.mxu0
    %v881 = vlaneseq
    %v882 = vand.u32 %v881, 127
    %vm883 = vcmp.lt.s32.totalorder %v882, 10
    %v884 = vsel %vm883, %v875, -1e+30
    %v885 = vsel %vm883, %v878, -1e+30
    %886 = vmax.xlane.f32.xlu0 %v884
    %v887 = vpop.xlane.xlu0 %886
    %888 = vmax.xlane.f32.xlu0 %v885
    %v889 = vpop.xlane.xlu0 %888
    %v890 = vsub.f32 %v884, %v887
    %v891 = vsub.f32 %v885, %v889
    %v892 = vmul.f32 %v890, 1.442695
    %v893 = vpow.pop %v892
    %v894 = vmul.f32 %v891, 1.442695
    %v895 = vpow.pop %v894
    %896 = vadd.xlane.f32.xlu0 %v893
    %v897 = vpop.xlane.xlu0 %896
    %898 = vadd.xlane.f32.xlu0 %v895
    %v899 = vpop.xlane.xlu0 %898
    %v900 = vlog2.pop %v897
    %v901 = vmul.f32 %v900, 0.6931472
    %v902 = vlog2.pop %v899
    %v903 = vmul.f32 %v902, 0.6931472
    %v904 = vsub.f32 %v890, %v901
    %v905 = vsub.f32 %v891, %v903
    %v906 = vpack.c.bf16 %v905, %v904
    %v908 = vunpack.c.l.b16 %v906
    %v909 = vunpack.c.h.b16 %v906
    %v910 = vpack.c.b16 %v908, %v908
    %v911 = vpack.c.b16 %v909, %v909
    %914 = vst [vmem:[%s7] sm:$0xf] %v910
    %915 = vst [vmem:[%s7 + $0x4] sm:$0xf] %v911
    // Predicated region
    $region34: #{net_forward.1} parent=1 // pred_check
      _
    $region35: #{net_forward.1} parent=1 // pred_check_branch
      %917 = sbr.rel (0) target = $region37
    $region36: #{net_forward.1} parent=1 // pred_region
      _
    $region37: #{net_forward.1} parent=1 // pred_fallthru
      _
    // Predicated region
    $region38: #{net_forward.1} parent=1 // pred_check
      _
    $region39: #{net_forward.1} parent=1 // pred_check_branch
      %919 = sbr.rel (0) target = $region41
    $region40: #{net_forward.1} parent=1 // pred_region
      _
    $region41: #{net_forward.1} parent=1 // pred_fallthru
      _
    %920 = vsyncpa [#allocation3], 1

</llo_original>
